<compile_context>
chip_gen: v7x
topology: tpu7x:2x2x1
jax: 0.10.0
libtpu: 0.0.40
codegen_flags: <defaults>
</compile_context>

<pallas_src>
import jax
import jax.numpy as jnp
from jax.experimental import pallas as pl
from jax.experimental.pallas import tpu as pltpu


def _prelu(x, a=1.0):
    # F.prelu with scalar weight (a == 1.0 -> identity). Reference only.
    return jnp.where(x >= 0, x, a * x)


def l2neighs_kernel(x_ref, self_ref,
                    wcat_ref, bcat_ref,
                    a1u_ref, a2_ref, a2b_ref,
                    a3_ref, a3b_ref,
                    out_ref):
    f32 = jnp.float32
    TN, P, K = x_ref.shape            # (nodes-per-step, paths, 4*D), bf16
    D = out_ref.shape[-1]

    # Flatten nodes*paths onto sublanes; lane dim (K = 4D = 128) unchanged.
    x = x_ref[...].reshape(TN * P, K)                          # bf16

    # One fused MXU matmul: [o | att1_o_pre] = x @ [Wc | Wc@A1o] + bcat.
    # (w_r1 -> w_r2 fusion is exact because F.prelu(., 1.0) is the identity.)
    y = jnp.dot(x, wcat_ref[...], preferred_element_type=f32) + bcat_ref[...]
    y = y.reshape(TN, P, 2 * D)                                # f32
    o = y[..., :D]                                             # (TN, P, D)
    a_pre = y[..., D:]                                         # (TN, P, D)

    # Self-embedding half of att1: computed once per node, broadcast over the
    # P paths via 3-D broadcasting (no materialized (TN*P, D) temp).
    su = jnp.dot(self_ref[...], a1u_ref[...],
                 preferred_element_type=f32)                   # (TN, D)
    a = jnp.maximum(a_pre + su[:, None, :], 0.0)               # relu(att1)

    # att2: bf16 operands on the MXU, f32 accumulation, f32 elementwise.
    a2 = jnp.dot(a.reshape(TN * P, D).astype(jnp.bfloat16), a2_ref[...],
                 preferred_element_type=f32) + a2b_ref[...]
    a2 = jnp.maximum(a2, 0.0)                                  # (TN*P, D)

    # att3 (D -> 1): VPU multiply + lane reduction, all f32.
    logits = jnp.sum(a2 * a3_ref[...], axis=-1, keepdims=True) + a3b_ref[...]
    lg = logits.reshape(TN, P, 1)

    # Softmax over the P level-2 paths of each node (f32, per node).
    m = jnp.max(lg, axis=1, keepdims=True)
    e = jnp.exp(lg - m)
    att = e / jnp.sum(e, axis=1, keepdims=True)                # (TN, P, 1)

    # att_l2neighs_e = (o^T @ att_w)^T == per-node weighted sum over paths.
    out_ref[...] = jnp.sum(att * o, axis=1).astype(out_ref.dtype)


def l2neighs_aggregator(x_cat, self_es, weights, *, tn=256):
    """x_cat: (N, P, 4D) pre-concatenated [r1, r2, neigh, attr_sum] features
    (bf16).  self_es: (N, D) self embeddings (bf16).  weights: see __main__."""
    N, P, K = x_cat.shape
    D = self_es.shape[-1]

    # Tile selection: multiple of 8 sublanes; ensure >= 2 grid steps when N
    # allows it so both v7x TensorCores receive work on the "parallel" axis.
    tn = max(8, (min(tn, 1024) // 8) * 8)
    if N > 8:
        tn = min(tn, ((pl.cdiv(N, 2) + 7) // 8) * 8)
    n_steps = pl.cdiv(N, tn)       # partial edge block; no jnp.pad copy

    # Explicit scoped-VMEM budget: double-buffered streams + resident weights
    # + room for the f32 intermediates (y / a / a2 at TN*P rows).
    stream = tn * (P * K * x_cat.dtype.itemsize
                   + D * self_es.dtype.itemsize + D * 4)
    w_bytes = sum(int(w.size) * w.dtype.itemsize for w in weights)
    interm = 12 * tn * P * D * 4
    vmem_limit = int(min(max(2 * stream + w_bytes + interm, 16 << 20),
                         48 << 20))

    def full_spec(w):
        # Constant block index -> weight stays VMEM-resident across steps.
        return pl.BlockSpec(w.shape, lambda i, nd=w.ndim: (0,) * nd)

    in_specs = [
        pl.BlockSpec((tn, P, K), lambda i: (i, 0, 0)),
        pl.BlockSpec((tn, D), lambda i: (i, 0)),
    ] + [full_spec(w) for w in weights]

    fn = pl.pallas_call(
        l2neighs_kernel,
        out_shape=jax.ShapeDtypeStruct((N, D), jnp.float32),
        grid_spec=pl.GridSpec(
            grid=(n_steps,),
            in_specs=in_specs,
            out_specs=pl.BlockSpec((tn, D), lambda i: (i, 0)),
        ),
        compiler_params=pltpu.CompilerParams(
            dimension_semantics=("parallel",),
            vmem_limit_bytes=vmem_limit),
    )
    return fn(x_cat, self_es, *weights)


def reference(r1_es, r2_es, nb_es, attr_es, self_es,
              W1, b1, W2, b2, A1, a1b, A2, a2b, A3, a3b):
    x = jnp.concatenate([r1_es, r2_es, nb_es, attr_es.sum(axis=2)], axis=-1)
    h1 = _prelu(jnp.einsum('npk,ok->npo', x, W1) + b1)
    o = _prelu(jnp.einsum('npk,ok->npo', h1, W2) + b2)
    u = jnp.broadcast_to(self_es[:, None, :], o.shape)
    xa = jnp.concatenate([o, u], axis=-1)
    a = jax.nn.relu(jnp.einsum('npk,ok->npo', xa, A1) + a1b)
    a = jax.nn.relu(jnp.einsum('npk,ok->npo', a, A2) + a2b)
    logits = jnp.einsum('npk,ok->npo', a, A3) + a3b
    att = jax.nn.softmax(logits, axis=1)
    return jnp.sum(att * o, axis=1)


if __name__ == "__main__":
    D = 32       # embed_dim
    N = 12       # number of nodes (exercises the partial edge block)
    P = 8        # level-2 paths per node
    A = 3        # attributes per level-2 neighbor
    NUM_UV = 20  # u2e / v2e vocab
    NUM_R = 6    # r2e vocab
    NUM_AT = 10  # ua2e / va2e vocab

    keys = jax.random.split(jax.random.PRNGKey(0), 16)

    # Embedding tables (uv=True branch -> u2e / ua2e used).
    u2e = jax.random.normal(keys[0], (NUM_UV, D), jnp.float32)
    r2e = jax.random.normal(keys[1], (NUM_R, D), jnp.float32)
    ua2e = jax.random.normal(keys[2], (NUM_AT, D), jnp.float32)

    def linear_init(k, fan_in, fan_out):
        kw, kb = jax.random.split(k)
        bound = 1.0 / (fan_in ** 0.5)
        W = jax.random.uniform(kw, (fan_out, fan_in), jnp.float32, -bound, bound)
        b = jax.random.uniform(kb, (fan_out,), jnp.float32, -bound, bound)
        return W, b

    W1, b1 = linear_init(keys[3], 4 * D, 2 * D)   # w_r1
    W2, b2 = linear_init(keys[4], 2 * D, D)       # w_r2
    A1, a1b = linear_init(keys[5], 2 * D, D)      # att.att1
    A2, a2b = linear_init(keys[6], D, D)          # att.att2
    A3, a3b = linear_init(keys[7], D, 1)          # att.att3

    # Synthetic graph inputs.
    nodes = jax.random.randint(keys[8], (N,), 0, NUM_UV)
    paths = jnp.stack([
        jax.random.randint(keys[9], (N, P), 0, NUM_R),    # r1
        jax.random.randint(keys[10], (N, P), 0, NUM_R),   # r2
        jax.random.randint(keys[11], (N, P), 0, NUM_UV),  # n2
    ], axis=-1)                                           # (N, P, 3)
    l2n_attrs = jax.random.randint(keys[12], (N, P, A), 0, NUM_AT)

    # Embedding gathers (glue; data-dependent indexing stays in JAX).
    r1_es = r2e[paths[..., 0]]        # (N, P, D)
    r2_es = r2e[paths[..., 1]]        # (N, P, D)
    nb_es = u2e[paths[..., 2]]        # (N, P, D)
    attr_es = ua2e[l2n_attrs]         # (N, P, A, D)
    self_es = u2e[nodes]              # (N, D)

    # Data prep: attr sum + concat, stored in HBM as bf16 (halves streaming
    # traffic and packs MXU LHS vregs 16-deep).
    x_cat = jnp.concatenate(
        [r1_es, r2_es, nb_es, attr_es.sum(axis=2)], axis=-1)   # (N, P, 4D)
    x_bf16 = x_cat.astype(jnp.bfloat16)
    self_bf16 = self_es.astype(jnp.bfloat16)

    # Fused weights (valid because F.prelu(., 1.0) == identity and dropout is
    # eval-mode identity).
    W1t, W2t = W1.T, W2.T
    Wc = W1t @ W2t                                  # (4D, D)  fused w_r1∘w_r2
    bc = b1 @ W2t + b2                              # (D,)
    A1t = A1.T
    A1o, A1u = A1t[:D], A1t[D:]                     # att1 halves (o / self)
    Wcat = jnp.concatenate([Wc, Wc @ A1o], axis=1)                # (4D, 2D)
    bcat = jnp.concatenate([bc, bc @ A1o + a1b]).reshape(1, -1)   # (1, 2D)

    weights = [
        Wcat.astype(jnp.bfloat16),        # fused [o | att1_o_pre] matmul
        bcat.astype(jnp.float32),         # its f32 bias
        A1u.astype(jnp.bfloat16),         # att1 half contracting with self
        A2.T.astype(jnp.bfloat16),        # att2 (D, D)
        a2b.reshape(1, -1),               # (1, D) f32
        A3,                               # (1, D) f32 att3 row (VPU reduce)
        a3b.reshape(1, 1),                # (1, 1) f32
    ]

    out = l2neighs_aggregator(x_bf16, self_bf16, weights, tn=8)
    out = jax.block_until_ready(out)

    ref = reference(r1_es, r2_es, nb_es, attr_es, self_es,
                    W1, b1, W2, b2, A1, a1b, A2, a2b, A3, a3b)
    assert out.shape == (N, D)
    assert bool(jnp.all(jnp.isfinite(out))), "non-finite output in valid rows"
    rel = float(jnp.max(jnp.abs(out - ref)) / (jnp.max(jnp.abs(ref)) + 1e-8))
    # bf16 MXU operands vs f32 reference -> relaxed, scale-normalized check.
    assert rel < 5e-2, f"mismatch vs f32 reference: rel max err {rel:.3e}"

    print("KERNEL_OK")
</pallas_src>

<mosaic_0001>
module attributes {stable_mosaic.version = 11 : i64} {
  func.func @l2neighs_kernel(%arg0: i32, %arg1: memref<8x8x128xbf16, #tpu.memory_space<vmem>>, %arg2: memref<8x32xbf16, #tpu.memory_space<vmem>>, %arg3: memref<128x64xbf16, #tpu.memory_space<vmem>>, %arg4: memref<1x64xf32, #tpu.memory_space<vmem>>, %arg5: memref<32x32xbf16, #tpu.memory_space<vmem>>, %arg6: memref<32x32xbf16, #tpu.memory_space<vmem>>, %arg7: memref<1x32xf32, #tpu.memory_space<vmem>>, %arg8: memref<1x32xf32, #tpu.memory_space<vmem>>, %arg9: memref<1x1xf32, #tpu.memory_space<vmem>>, %arg10: memref<8x32xf32, #tpu.memory_space<vmem>>) attributes {dimension_semantics = [#tpu.dimension_semantics<parallel>], iteration_bounds = array<i64: 2>, scalar_prefetch = 0 : i64, scratch_operands = 0 : i64, tpu.core_type = #tpu.core_type<tc>, window_params = [{transform_indices = @transform_0, window_bounds = array<i64: 8, 8, 128>}, {transform_indices = @transform_1, window_bounds = array<i64: 8, 32>}, {pipeline_mode = #tpu.pipeline_mode<synchronous>, transform_indices = @transform_2, window_bounds = array<i64: 128, 64>}, {pipeline_mode = #tpu.pipeline_mode<synchronous>, transform_indices = @transform_3, window_bounds = array<i64: 1, 64>}, {pipeline_mode = #tpu.pipeline_mode<synchronous>, transform_indices = @transform_4, window_bounds = array<i64: 32, 32>}, {pipeline_mode = #tpu.pipeline_mode<synchronous>, transform_indices = @transform_5, window_bounds = array<i64: 32, 32>}, {pipeline_mode = #tpu.pipeline_mode<synchronous>, transform_indices = @transform_6, window_bounds = array<i64: 1, 32>}, {pipeline_mode = #tpu.pipeline_mode<synchronous>, transform_indices = @transform_7, window_bounds = array<i64: 1, 32>}, {pipeline_mode = #tpu.pipeline_mode<synchronous>, transform_indices = @transform_8, window_bounds = array<i64: 1, 1>}, {transform_indices = @transform_9, window_bounds = array<i64: 8, 32>}]} {
    %c0 = arith.constant 0 : index
    %c0_0 = arith.constant 0 : index
    %c0_1 = arith.constant 0 : index
    %0 = vector.load %arg1[%c0, %c0_0, %c0_1] : memref<8x8x128xbf16, #tpu.memory_space<vmem>>, vector<8x8x128xbf16>
    %1 = vector.shape_cast %0 : vector<8x8x128xbf16> to vector<64x128xbf16>
    %c0_2 = arith.constant 0 : index
    %c0_3 = arith.constant 0 : index
    %2 = vector.load %arg3[%c0_2, %c0_3] : memref<128x64xbf16, #tpu.memory_space<vmem>>, vector<128x64xbf16>
    %cst = arith.constant dense<0.000000e+00> : vector<64x64xf32>
    %3 = tpu.matmul %1, %2, %cst {dimension_numbers = #tpu.dot_dimension_numbers<[1], [0], [0], [1], [0, 0, 1, 1], [], []>} : vector<64x128xbf16>, vector<128x64xbf16>, vector<64x64xf32> -> vector<64x64xf32>
    %c0_4 = arith.constant 0 : index
    %c0_5 = arith.constant 0 : index
    %4 = vector.load %arg4[%c0_4, %c0_5] : memref<1x64xf32, #tpu.memory_space<vmem>>, vector<1x64xf32>
    %5 = vector.broadcast %4 : vector<1x64xf32> to vector<64x64xf32>
    %6 = arith.addf %3, %5 : vector<64x64xf32>
    %7 = vector.shape_cast %6 : vector<64x64xf32> to vector<8x8x64xf32>
    %8 = vector.extract_strided_slice %7 {offsets = [0, 0, 0], sizes = [8, 8, 32], strides = [1, 1, 1]} : vector<8x8x64xf32> to vector<8x8x32xf32>
    %9 = vector.extract_strided_slice %7 {offsets = [0, 0, 32], sizes = [8, 8, 32], strides = [1, 1, 1]} : vector<8x8x64xf32> to vector<8x8x32xf32>
    %c0_6 = arith.constant 0 : index
    %c0_7 = arith.constant 0 : index
    %10 = vector.load %arg2[%c0_6, %c0_7] : memref<8x32xbf16, #tpu.memory_space<vmem>>, vector<8x32xbf16>
    %c0_8 = arith.constant 0 : index
    %c0_9 = arith.constant 0 : index
    %11 = vector.load %arg5[%c0_8, %c0_9] : memref<32x32xbf16, #tpu.memory_space<vmem>>, vector<32x32xbf16>
    %cst_10 = arith.constant dense<0.000000e+00> : vector<8x32xf32>
    %12 = tpu.matmul %10, %11, %cst_10 {dimension_numbers = #tpu.dot_dimension_numbers<[1], [0], [0], [1], [0, 0, 1, 1], [], []>} : vector<8x32xbf16>, vector<32x32xbf16>, vector<8x32xf32> -> vector<8x32xf32>
    %13 = vector.shape_cast %12 : vector<8x32xf32> to vector<8x1x32xf32>
    %14 = vector.broadcast %13 : vector<8x1x32xf32> to vector<8x8x32xf32>
    %15 = arith.addf %9, %14 : vector<8x8x32xf32>
    %cst_11 = arith.constant 0.000000e+00 : f32
    %16 = vector.broadcast %cst_11 : f32 to vector<8x8x32xf32>
    %17 = arith.maximumf %15, %16 : vector<8x8x32xf32>
    %18 = vector.shape_cast %17 : vector<8x8x32xf32> to vector<64x32xf32>
    %19 = arith.truncf %18 : vector<64x32xf32> to vector<64x32xbf16>
    %c0_12 = arith.constant 0 : index
    %c0_13 = arith.constant 0 : index
    %20 = vector.load %arg6[%c0_12, %c0_13] : memref<32x32xbf16, #tpu.memory_space<vmem>>, vector<32x32xbf16>
    %cst_14 = arith.constant dense<0.000000e+00> : vector<64x32xf32>
    %21 = tpu.matmul %19, %20, %cst_14 {dimension_numbers = #tpu.dot_dimension_numbers<[1], [0], [0], [1], [0, 0, 1, 1], [], []>} : vector<64x32xbf16>, vector<32x32xbf16>, vector<64x32xf32> -> vector<64x32xf32>
    %c0_15 = arith.constant 0 : index
    %c0_16 = arith.constant 0 : index
    %22 = vector.load %arg7[%c0_15, %c0_16] : memref<1x32xf32, #tpu.memory_space<vmem>>, vector<1x32xf32>
    %23 = vector.broadcast %22 : vector<1x32xf32> to vector<64x32xf32>
    %24 = arith.addf %21, %23 : vector<64x32xf32>
    %cst_17 = arith.constant 0.000000e+00 : f32
    %25 = vector.broadcast %cst_17 : f32 to vector<64x32xf32>
    %26 = arith.maximumf %24, %25 : vector<64x32xf32>
    %c0_18 = arith.constant 0 : index
    %c0_19 = arith.constant 0 : index
    %27 = vector.load %arg8[%c0_18, %c0_19] : memref<1x32xf32, #tpu.memory_space<vmem>>, vector<1x32xf32>
    %28 = vector.broadcast %27 : vector<1x32xf32> to vector<64x32xf32>
    %29 = arith.mulf %26, %28 : vector<64x32xf32>
    %cst_20 = arith.constant dense<0.000000e+00> : vector<64xf32>
    %30 = vector.multi_reduction <add>, %29, %cst_20 [1] : vector<64x32xf32> to vector<64xf32>
    %31 = vector.shape_cast %30 : vector<64xf32> to vector<64x1xf32>
    %c0_21 = arith.constant 0 : index
    %c0_22 = arith.constant 0 : index
    %32 = vector.load %arg9[%c0_21, %c0_22] : memref<1x1xf32, #tpu.memory_space<vmem>>, vector<1x1xf32>
    %33 = vector.broadcast %32 : vector<1x1xf32> to vector<64x1xf32>
    %34 = arith.addf %31, %33 : vector<64x1xf32>
    %35 = vector.shape_cast %34 : vector<64x1xf32> to vector<8x8x1xf32>
    %cst_23 = arith.constant dense<0xFF800000> : vector<8x1xf32>
    %36 = vector.multi_reduction <maximumf>, %35, %cst_23 [1] : vector<8x8x1xf32> to vector<8x1xf32>
    %37 = vector.shape_cast %36 : vector<8x1xf32> to vector<8x1x1xf32>
    %38 = vector.broadcast %37 : vector<8x1x1xf32> to vector<8x8x1xf32>
    %39 = arith.subf %35, %38 : vector<8x8x1xf32>
    %40 = math.exp %39 : vector<8x8x1xf32>
    %cst_24 = arith.constant dense<0.000000e+00> : vector<8x1xf32>
    %41 = vector.multi_reduction <add>, %40, %cst_24 [1] : vector<8x8x1xf32> to vector<8x1xf32>
    %42 = vector.shape_cast %41 : vector<8x1xf32> to vector<8x1x1xf32>
    %43 = vector.broadcast %42 : vector<8x1x1xf32> to vector<8x8x1xf32>
    %44 = arith.divf %40, %43 : vector<8x8x1xf32>
    %45 = vector.broadcast %44 : vector<8x8x1xf32> to vector<8x8x32xf32>
    %46 = arith.mulf %45, %8 : vector<8x8x32xf32>
    %cst_25 = arith.constant dense<0.000000e+00> : vector<8x32xf32>
    %47 = vector.multi_reduction <add>, %46, %cst_25 [1] : vector<8x8x32xf32> to vector<8x32xf32>
    %c0_26 = arith.constant 0 : index
    %c0_27 = arith.constant 0 : index
    %48 = vector.load %arg10[%c0_26, %c0_27] : memref<8x32xf32, #tpu.memory_space<vmem>>, vector<8x32xf32>
    tpu.vector_store %arg10[%c0_26, %c0_27], %47 {strides = array<i32>} : memref<8x32xf32, #tpu.memory_space<vmem>>, vector<8x32xf32>,
    return
  }
  func.func @transform_0(%arg0: i32) -> (i32, i32, i32) {
    %c0_i32 = arith.constant 0 : i32
    %c0_i32_0 = arith.constant 0 : i32
    %c0_i32_1 = arith.constant 0 : i32
    return %arg0, %c0_i32, %c0_i32_0 : i32, i32, i32
  }
  func.func @transform_1(%arg0: i32) -> (i32, i32) {
    %c0_i32 = arith.constant 0 : i32
    %c0_i32_0 = arith.constant 0 : i32
    return %arg0, %c0_i32 : i32, i32
  }
  func.func @transform_2(%arg0: i32) -> (i32, i32) {
    %c0_i32 = arith.constant 0 : i32
    %c0_i32_0 = arith.constant 0 : i32
    %c0_i32_1 = arith.constant 0 : i32
    return %c0_i32, %c0_i32_0 : i32, i32
  }
  func.func @transform_3(%arg0: i32) -> (i32, i32) {
    %c0_i32 = arith.constant 0 : i32
    %c0_i32_0 = arith.constant 0 : i32
    %c0_i32_1 = arith.constant 0 : i32
    return %c0_i32, %c0_i32_0 : i32, i32
  }
  func.func @transform_4(%arg0: i32) -> (i32, i32) {
    %c0_i32 = arith.constant 0 : i32
    %c0_i32_0 = arith.constant 0 : i32
    %c0_i32_1 = arith.constant 0 : i32
    return %c0_i32, %c0_i32_0 : i32, i32
  }
  func.func @transform_5(%arg0: i32) -> (i32, i32) {
    %c0_i32 = arith.constant 0 : i32
    %c0_i32_0 = arith.constant 0 : i32
    %c0_i32_1 = arith.constant 0 : i32
    return %c0_i32, %c0_i32_0 : i32, i32
  }
  func.func @transform_6(%arg0: i32) -> (i32, i32) {
    %c0_i32 = arith.constant 0 : i32
    %c0_i32_0 = arith.constant 0 : i32
    %c0_i32_1 = arith.constant 0 : i32
    return %c0_i32, %c0_i32_0 : i32, i32
  }
  func.func @transform_7(%arg0: i32) -> (i32, i32) {
    %c0_i32 = arith.constant 0 : i32
    %c0_i32_0 = arith.constant 0 : i32
    %c0_i32_1 = arith.constant 0 : i32
    return %c0_i32, %c0_i32_0 : i32, i32
  }
  func.func @transform_8(%arg0: i32) -> (i32, i32) {
    %c0_i32 = arith.constant 0 : i32
    %c0_i32_0 = arith.constant 0 : i32
    %c0_i32_1 = arith.constant 0 : i32
    return %c0_i32, %c0_i32_0 : i32, i32
  }
  func.func @transform_9(%arg0: i32) -> (i32, i32) {
    %c0_i32 = arith.constant 0 : i32
    %c0_i32_0 = arith.constant 0 : i32
    return %arg0, %c0_i32 : i32, i32
  }
}

</mosaic_0001>

<llo_original>
// kernel: tpu_custom_call.1
$region0: #{tpu_custom_call.1}
  #allocation0 [shape = 'u32[]', space=smem, size = 0x4, offset = 0x4, fixed_abs, tag = 'smem constant byte address 0x4 - core index']
  #allocation1 [shape = 'u32[144,128]{1,0:T(1,128)}', space=vmem, size = 0x12000, scoped, tag = 'internal scratch']
  #allocation2 [shape = 'f32[1,1]{1,0:T(1,128)S(1)}', space=vmem, size = 0x200, scoped, tag = 'scoped memory for tpu_custom_call.1']
  %s0 = inlined_call_operand.vmem [shape: bf16[12,8,128], index: 0, kind: input, shape index: {}]
  %s1 = inlined_call_operand.vmem [shape: bf16[12,32], index: 1, kind: input, shape index: {}]
  %s2 = inlined_call_operand.vmem [shape: bf16[128,64], index: 2, kind: input, shape index: {}]
  %s3 = inlined_call_operand.vmem [shape: f32[1,64], index: 3, kind: input, shape index: {}]
  %s4 = inlined_call_operand.vmem [shape: bf16[32,32], index: 4, kind: input, shape index: {}]
  %s5 = inlined_call_operand.vmem [shape: bf16[32,32], index: 5, kind: input, shape index: {}]
  %s6 = inlined_call_operand.vmem [shape: f32[1,32], index: 6, kind: input, shape index: {}]
  %s7 = inlined_call_operand.vmem [shape: f32[1,32], index: 7, kind: input, shape index: {}]
  %s8 = inlined_call_operand.<no memory space> [shape: f32[1,1], index: 8, kind: input, shape index: {}]
  %s9 = inlined_call_operand.hbm [shape: f32[12,32], index: 9, kind: output, shape index: {}]
  %s10 = sld [smem:[#allocation0]]
  $region69: #{tpu_custom_call.1} parent=0
    _
  %s12 = ssub.s32 1, %s10
  %s13 = scalar_select 0, %s12, %s10
  %v14 = vstv %s8
  %15 = vst [vmem:[#allocation2] sm:$0x1] %v14
  $region1: #{tpu_custom_call.1} parent=0
    #allocation3 [shape = 'u8[8192]{0}', space=vmem, size = 0x2000, scoped, tag = 'output window, operand 0']
    #allocation4 [shape = 's32[2]{0}', space=sflag, size = 0x8, scoped, tag = 'scoped memory for tpu_custom_call.1']
    %16 = vsyncpa [#allocation4], 0
    %s17 = scalar_lea.sflag [#allocation4], 1
    %18 = vsyncpa %s17, 0
    loop: start=0, step=1, limit=4
    $region2: #{tpu_custom_call.1} parent=1 // loop_pre_header
      _
    $region3: #{tpu_custom_call.1} parent=1 // loop_header
      %s20 = sphi 0, %s24
      %p21 = scmp.ge.s32.totalorder %s20, 4
      %s30 = sphi 0, %s32
      %s33 = sphi 0, %s30
      %s34 = sphi 0, %s33
      %s50 = sphi 0, %s34
      %s56 = sphi 0, %s58
      %s59 = sphi 0, %s56
      %s60 = sphi 0, %s59
      %s76 = sphi 0, %s60
      %s80 = sphi 0, %s80
      %s82 = sphi 0, %s80
      %s83 = sphi 0, %s82
      %s97 = sphi 0, %s83
      %s101 = sphi 0, %s101
      %s103 = sphi 0, %s101
      %s104 = sphi 0, %s103
      %s118 = sphi 0, %s104
      %s122 = sphi 0, %s122
      %s124 = sphi 0, %s122
      %s125 = sphi 0, %s124
      %s139 = sphi 0, %s125
      %s143 = sphi 0, %s143
      %s145 = sphi 0, %s143
      %s146 = sphi 0, %s145
      %s160 = sphi 0, %s146
      %s164 = sphi 0, %s164
      %s166 = sphi 0, %s164
      %s167 = sphi 0, %s166
      %s181 = sphi 0, %s167
      %s185 = sphi 0, %s185
      %s187 = sphi 0, %s185
      %s188 = sphi 0, %s187
      %s202 = sphi 0, %s188
      %s206 = sphi 0, %s206
      %s208 = sphi 0, %s206
      %s209 = sphi 0, %s208
      %s223 = sphi 0, %s209
      %s229 = sphi 0, %s231
      %s232 = sphi 0, %s229
      %s233 = sphi 0, %s232
      %s249 = sphi 0, %s233
    $region4: #{tpu_custom_call.1} parent=1 // loop_header_branch
      %23 = sbr.rel (%p21) target = $region8
    $region5: #{tpu_custom_call.1} parent=1 // loop_body
      %s25 = ssub.s32 %s20, 1
      %s26 = ssub.s32 %s20, 2
      %s27 = sadd.s32 %s20, 1
      %s28 = ssub.s32 %s20, %s27
      %p29 = scmp.eq.s32.totalorder %s28, 0
      %s31 = sadd.s32 %s30, 1
      %s32 = scalar_select %p29, %s30, %s31
      %p35 = pneg %p29
      %p36 = scmp.eq.s32.totalorder %s20, 1
      %p37 = por %p35, %p36
      %p38 = scmp.ne.s32.totalorder %s30, %s33
      %p39 = scmp.eq.s32.totalorder %s20, 0
      %p40 = por %p38, %p39
      %p41 = scmp.ne.s32.totalorder %s30, %s33
      %p42 = scmp.eq.s32.totalorder %s25, 1
      %p43 = por %p41, %p42
      %p44 = scmp.ne.s32.totalorder %s33, %s34
      %p45 = scmp.eq.s32.totalorder %s25, 0
      %p46 = por %p44, %p45
      %p47 = scmp.ne.s32.totalorder %s33, %s34
      %p48 = scmp.eq.s32.totalorder %s26, 1
      %p49 = por %p47, %p48
      %p51 = scmp.ne.s32.totalorder %s34, %s50
      %p52 = scmp.eq.s32.totalorder %s26, 0
      %p53 = por %p51, %p52
      %s54 = ssub.s32 %s20, %s27
      %p55 = scmp.eq.s32.totalorder %s54, 0
      %s57 = sadd.s32 %s56, 1
      %s58 = scalar_select %p55, %s56, %s57
      %p61 = pneg %p55
      %p62 = scmp.eq.s32.totalorder %s20, 1
      %p63 = por %p61, %p62
      %p64 = scmp.ne.s32.totalorder %s56, %s59
      %p65 = scmp.eq.s32.totalorder %s20, 0
      %p66 = por %p64, %p65
      %p67 = scmp.ne.s32.totalorder %s56, %s59
      %p68 = scmp.eq.s32.totalorder %s25, 1
      %p69 = por %p67, %p68
      %p70 = scmp.ne.s32.totalorder %s59, %s60
      %p71 = scmp.eq.s32.totalorder %s25, 0
      %p72 = por %p70, %p71
      %p73 = scmp.ne.s32.totalorder %s59, %s60
      %p74 = scmp.eq.s32.totalorder %s26, 1
      %p75 = por %p73, %p74
      %p77 = scmp.ne.s32.totalorder %s60, %s76
      %p78 = scmp.eq.s32.totalorder %s26, 0
      %p79 = por %p77, %p78
      %s81 = sadd.s32 %s80, 1
      %p84 = scmp.eq.s32.totalorder %s20, 1
      %p85 = scmp.ne.s32.totalorder %s80, %s82
      %p86 = scmp.eq.s32.totalorder %s20, 0
      %p87 = por %p85, %p86
      %p88 = scmp.ne.s32.totalorder %s80, %s82
      %p89 = scmp.eq.s32.totalorder %s25, 1
      %p90 = por %p88, %p89
      %p91 = scmp.ne.s32.totalorder %s82, %s83
      %p92 = scmp.eq.s32.totalorder %s25, 0
      %p93 = por %p91, %p92
      %p94 = scmp.ne.s32.totalorder %s82, %s83
      %p95 = scmp.eq.s32.totalorder %s26, 1
      %p96 = por %p94, %p95
      %p98 = scmp.ne.s32.totalorder %s83, %s97
      %p99 = scmp.eq.s32.totalorder %s26, 0
      %p100 = por %p98, %p99
      %s102 = sadd.s32 %s101, 1
      %p105 = scmp.eq.s32.totalorder %s20, 1
      %p106 = scmp.ne.s32.totalorder %s101, %s103
      %p107 = scmp.eq.s32.totalorder %s20, 0
      %p108 = por %p106, %p107
      %p109 = scmp.ne.s32.totalorder %s101, %s103
      %p110 = scmp.eq.s32.totalorder %s25, 1
      %p111 = por %p109, %p110
      %p112 = scmp.ne.s32.totalorder %s103, %s104
      %p113 = scmp.eq.s32.totalorder %s25, 0
      %p114 = por %p112, %p113
      %p115 = scmp.ne.s32.totalorder %s103, %s104
      %p116 = scmp.eq.s32.totalorder %s26, 1
      %p117 = por %p115, %p116
      %p119 = scmp.ne.s32.totalorder %s104, %s118
      %p120 = scmp.eq.s32.totalorder %s26, 0
      %p121 = por %p119, %p120
      %s123 = sadd.s32 %s122, 1
      %p126 = scmp.eq.s32.totalorder %s20, 1
      %p127 = scmp.ne.s32.totalorder %s122, %s124
      %p128 = scmp.eq.s32.totalorder %s20, 0
      %p129 = por %p127, %p128
      %p130 = scmp.ne.s32.totalorder %s122, %s124
      %p131 = scmp.eq.s32.totalorder %s25, 1
      %p132 = por %p130, %p131
      %p133 = scmp.ne.s32.totalorder %s124, %s125
      %p134 = scmp.eq.s32.totalorder %s25, 0
      %p135 = por %p133, %p134
      %p136 = scmp.ne.s32.totalorder %s124, %s125
      %p137 = scmp.eq.s32.totalorder %s26, 1
      %p138 = por %p136, %p137
      %p140 = scmp.ne.s32.totalorder %s125, %s139
      %p141 = scmp.eq.s32.totalorder %s26, 0
      %p142 = por %p140, %p141
      %s144 = sadd.s32 %s143, 1
      %p147 = scmp.eq.s32.totalorder %s20, 1
      %p148 = scmp.ne.s32.totalorder %s143, %s145
      %p149 = scmp.eq.s32.totalorder %s20, 0
      %p150 = por %p148, %p149
      %p151 = scmp.ne.s32.totalorder %s143, %s145
      %p152 = scmp.eq.s32.totalorder %s25, 1
      %p153 = por %p151, %p152
      %p154 = scmp.ne.s32.totalorder %s145, %s146
      %p155 = scmp.eq.s32.totalorder %s25, 0
      %p156 = por %p154, %p155
      %p157 = scmp.ne.s32.totalorder %s145, %s146
      %p158 = scmp.eq.s32.totalorder %s26, 1
      %p159 = por %p157, %p158
      %p161 = scmp.ne.s32.totalorder %s146, %s160
      %p162 = scmp.eq.s32.totalorder %s26, 0
      %p163 = por %p161, %p162
      %s165 = sadd.s32 %s164, 1
      %p168 = scmp.eq.s32.totalorder %s20, 1
      %p169 = scmp.ne.s32.totalorder %s164, %s166
      %p170 = scmp.eq.s32.totalorder %s20, 0
      %p171 = por %p169, %p170
      %p172 = scmp.ne.s32.totalorder %s164, %s166
      %p173 = scmp.eq.s32.totalorder %s25, 1
      %p174 = por %p172, %p173
      %p175 = scmp.ne.s32.totalorder %s166, %s167
      %p176 = scmp.eq.s32.totalorder %s25, 0
      %p177 = por %p175, %p176
      %p178 = scmp.ne.s32.totalorder %s166, %s167
      %p179 = scmp.eq.s32.totalorder %s26, 1
      %p180 = por %p178, %p179
      %p182 = scmp.ne.s32.totalorder %s167, %s181
      %p183 = scmp.eq.s32.totalorder %s26, 0
      %p184 = por %p182, %p183
      %s186 = sadd.s32 %s185, 1
      %p189 = scmp.eq.s32.totalorder %s20, 1
      %p190 = scmp.ne.s32.totalorder %s185, %s187
      %p191 = scmp.eq.s32.totalorder %s20, 0
      %p192 = por %p190, %p191
      %p193 = scmp.ne.s32.totalorder %s185, %s187
      %p194 = scmp.eq.s32.totalorder %s25, 1
      %p195 = por %p193, %p194
      %p196 = scmp.ne.s32.totalorder %s187, %s188
      %p197 = scmp.eq.s32.totalorder %s25, 0
      %p198 = por %p196, %p197
      %p199 = scmp.ne.s32.totalorder %s187, %s188
      %p200 = scmp.eq.s32.totalorder %s26, 1
      %p201 = por %p199, %p200
      %p203 = scmp.ne.s32.totalorder %s188, %s202
      %p204 = scmp.eq.s32.totalorder %s26, 0
      %p205 = por %p203, %p204
      %s207 = sadd.s32 %s206, 1
      %p210 = scmp.eq.s32.totalorder %s20, 1
      %p211 = scmp.ne.s32.totalorder %s206, %s208
      %p212 = scmp.eq.s32.totalorder %s20, 0
      %p213 = por %p211, %p212
      %p214 = scmp.ne.s32.totalorder %s206, %s208
      %p215 = scmp.eq.s32.totalorder %s25, 1
      %p216 = por %p214, %p215
      %p217 = scmp.ne.s32.totalorder %s208, %s209
      %p218 = scmp.eq.s32.totalorder %s25, 0
      %p219 = por %p217, %p218
      %p220 = scmp.ne.s32.totalorder %s208, %s209
      %p221 = scmp.eq.s32.totalorder %s26, 1
      %p222 = por %p220, %p221
      %p224 = scmp.ne.s32.totalorder %s209, %s223
      %p225 = scmp.eq.s32.totalorder %s26, 0
      %p226 = por %p224, %p225
      %s227 = ssub.s32 %s20, %s27
      %p228 = scmp.eq.s32.totalorder %s227, 0
      %s230 = sadd.s32 %s229, 1
      %s231 = scalar_select %p228, %s229, %s230
      %p234 = pneg %p228
      %p235 = scmp.eq.s32.totalorder %s20, 1
      %p236 = por %p234, %p235
      %p237 = scmp.ne.s32.totalorder %s229, %s232
      %p238 = scmp.eq.s32.totalorder %s20, 0
      %p239 = por %p237, %p238
      %p240 = scmp.ne.s32.totalorder %s229, %s232
      %p241 = scmp.eq.s32.totalorder %s25, 1
      %p242 = por %p240, %p241
      %p243 = scmp.ne.s32.totalorder %s232, %s233
      %p244 = scmp.eq.s32.totalorder %s25, 0
      %p245 = por %p243, %p244
      %p246 = scmp.ne.s32.totalorder %s232, %s233
      %p247 = scmp.eq.s32.totalorder %s26, 1
      %p248 = por %p246, %p247
      %p250 = scmp.ne.s32.totalorder %s233, %s249
      %p251 = scmp.eq.s32.totalorder %s26, 0
      %p252 = por %p250, %p251
      %p253 = scmp.le.s32.totalorder 1, %s20
      %p254 = scmp.lt.s32.totalorder %s20, 3
      %p255 = pnand %p253, %p254
      %p256 = pneg %p255
      // Predicated region
      $region9: #{tpu_custom_call.1} parent=5 // pred_check
        _
      $region10: #{tpu_custom_call.1} parent=5 // pred_check_branch
        %258 = sbr.rel (%p255) target = $region12
      $region11: #{tpu_custom_call.1} parent=5 // pred_region
        %s259 = ssub.s32 %s20, 1
        // Predicated region
        $region13: #{tpu_custom_call.1} parent=11 // pred_check
          %p260 = pneg %p93
        $region14: #{tpu_custom_call.1} parent=11 // pred_check_branch
          %262 = sbr.rel (%p260) target = $region16
        $region15: #{tpu_custom_call.1} parent=11 // pred_region
          _
        $region16: #{tpu_custom_call.1} parent=11 // pred_fallthru
          _
        // Predicated region
        $region17: #{tpu_custom_call.1} parent=11 // pred_check
          %p263 = pneg %p114
        $region18: #{tpu_custom_call.1} parent=11 // pred_check_branch
          %265 = sbr.rel (%p263) target = $region20
        $region19: #{tpu_custom_call.1} parent=11 // pred_region
          _
        $region20: #{tpu_custom_call.1} parent=11 // pred_fallthru
          _
        // Predicated region
        $region21: #{tpu_custom_call.1} parent=11 // pred_check
          %p266 = pneg %p135
        $region22: #{tpu_custom_call.1} parent=11 // pred_check_branch
          %268 = sbr.rel (%p266) target = $region24
        $region23: #{tpu_custom_call.1} parent=11 // pred_region
          _
        $region24: #{tpu_custom_call.1} parent=11 // pred_fallthru
          _
        // Predicated region
        $region25: #{tpu_custom_call.1} parent=11 // pred_check
          %p269 = pneg %p156
        $region26: #{tpu_custom_call.1} parent=11 // pred_check_branch
          %271 = sbr.rel (%p269) target = $region28
        $region27: #{tpu_custom_call.1} parent=11 // pred_region
          _
        $region28: #{tpu_custom_call.1} parent=11 // pred_fallthru
          _
        // Predicated region
        $region29: #{tpu_custom_call.1} parent=11 // pred_check
          %p272 = pneg %p177
        $region30: #{tpu_custom_call.1} parent=11 // pred_check_branch
          %274 = sbr.rel (%p272) target = $region32
        $region31: #{tpu_custom_call.1} parent=11 // pred_region
          _
        $region32: #{tpu_custom_call.1} parent=11 // pred_fallthru
          _
        // Predicated region
        $region33: #{tpu_custom_call.1} parent=11 // pred_check
          %p275 = pneg %p198
        $region34: #{tpu_custom_call.1} parent=11 // pred_check_branch
          %277 = sbr.rel (%p275) target = $region36
        $region35: #{tpu_custom_call.1} parent=11 // pred_region
          _
        $region36: #{tpu_custom_call.1} parent=11 // pred_fallthru
          _
        // Predicated region
        $region37: #{tpu_custom_call.1} parent=11 // pred_check
          %p278 = pneg %p219
        $region38: #{tpu_custom_call.1} parent=11 // pred_check_branch
          %280 = sbr.rel (%p278) target = $region40
        $region39: #{tpu_custom_call.1} parent=11 // pred_region
          _
        $region40: #{tpu_custom_call.1} parent=11 // pred_fallthru
          _
      $region12: #{tpu_custom_call.1} parent=5 // pred_fallthru
        _
      %p281 = scmp.lt.s32.totalorder %s20, 2
      // Predicated region
      $region41: #{tpu_custom_call.1} parent=5 // pred_check
        %p282 = pneg %p281
      $region42: #{tpu_custom_call.1} parent=5 // pred_check_branch
        %284 = sbr.rel (%p282) target = $region44
      $region43: #{tpu_custom_call.1} parent=5 // pred_region
        // Predicated region
        $region45: #{tpu_custom_call.1} parent=43 // pred_check
          %p285 = pneg %p40
        $region46: #{tpu_custom_call.1} parent=43 // pred_check_branch
          %287 = sbr.rel (%p285) target = $region48
        $region47: #{tpu_custom_call.1} parent=43 // pred_region
          %s288 = smul.u32 8, %s20
          %s289 = ssub.s32 12, %s288
          %p290 = scmp.lt.s32.totalorder %s289, 8
          %s291 = scalar_select %p290, %s289, 8
          %s292 = smul.u32 64, %s291
          %p293 = scmp.lt.s32.totalorder %s288, 11
          %s294 = scalar_select %p293, %s288, 11
          %s295 = smul.addr %s294, 4
          %s296 = scalar_lea.vmem %s0, %s295
          %s297 = smul.u32 8, %s20
          %s298 = ssub.s32 12, %s297
          %p299 = scmp.lt.s32.totalorder %s298, 8
          %s300 = scalar_select %p299, %s298, 8
          %s301 = smul.u32 64, %s300
        $region48: #{tpu_custom_call.1} parent=43 // pred_fallthru
          _
        // Predicated region
        $region49: #{tpu_custom_call.1} parent=43 // pred_check
          %p302 = pneg %p66
        $region50: #{tpu_custom_call.1} parent=43 // pred_check_branch
          %304 = sbr.rel (%p302) target = $region52
        $region51: #{tpu_custom_call.1} parent=43 // pred_region
          %p305 = scmp.lt.s32.totalorder %s20, 1
          %s306 = scalar_select %p305, %s20, 1
          %s307 = smul.addr %s306, 4
          %s308 = scalar_lea.vmem %s1, %s307
        $region52: #{tpu_custom_call.1} parent=43 // pred_fallthru
          _
      $region44: #{tpu_custom_call.1} parent=5 // pred_fallthru
        _
      %p309 = scmp.le.s32.totalorder 1, %s20
      %p310 = scmp.lt.s32.totalorder %s20, 3
      %p311 = pnand %p309, %p310
      %p312 = pneg %p311
      // Predicated region
      $region53: #{tpu_custom_call.1} parent=5 // pred_check
        _
      $region54: #{tpu_custom_call.1} parent=5 // pred_check_branch
        %314 = sbr.rel (%p311) target = $region56
      $region55: #{tpu_custom_call.1} parent=5 // pred_region
        %s315 = ssub.s32 %s20, 1
        %s316 = smul.u32 8, %s25
        %s317 = ssub.s32 12, %s316
        %p318 = scmp.lt.s32.totalorder %s317, 8
        %s319 = scalar_select %p318, %s317, 8
        %s320 = smul.u32 64, %s319
        %p321 = scmp.lt.s32.totalorder %s316, 11
        %s322 = scalar_select %p321, %s316, 11
        %s323 = smul.addr %s322, 4
        %s324 = scalar_lea.vmem %s0, %s323
        %p325 = pneg %p46
        %p326 = pneg %p43
        %p327 = scmp.lt.s32.totalorder %s25, 1
        %s328 = scalar_select %p327, %s25, 1
        %s329 = smul.addr %s328, 4
        %s330 = scalar_lea.vmem %s1, %s329
        %p331 = pneg %p72
        %p332 = pneg %p69
        %p333 = pneg %p93
        %p334 = pneg %p90
        %p335 = pneg %p114
        %p336 = pneg %p111
        %p337 = pneg %p135
        %p338 = pneg %p132
        %p339 = pneg %p156
        %p340 = pneg %p153
        %p341 = pneg %p177
        %p342 = pneg %p174
        %p343 = pneg %p198
        %p344 = pneg %p195
        %p345 = pneg %p219
        %p346 = pneg %p216
        %p347 = pneg %p245
        %p348 = pneg %p242
        %s349 = sand.u32 %s232, 1
        %s350 = scalar_lea.sflag [#allocation4], %s349
        %s351 = sand.u32 %s232, 1
        %s352 = smul.addr %s351, 8
        %s353 = scalar_lea.vmem [#allocation3], %s352
        %s354 = smul.u32 8, %s25
        %s355 = ssub.s32 12, %s354
        %p356 = scmp.lt.s32.totalorder %s355, 8
        %s357 = scalar_select %p356, %s355, 8
        %s358 = smul.u32 64, %s357
        %p359 = scmp.lt.s32.totalorder %s354, 11
        %s360 = scalar_select %p359, %s354, 11
        %s361 = smul.addr %s360, 4
        %s362 = scalar_lea.vmem %s0, %s361
        %s363 = smul.u32 8, %s25
        %s364 = ssub.s32 12, %s363
        %p365 = scmp.lt.s32.totalorder %s364, 8
        %s366 = scalar_select %p365, %s364, 8
        %s367 = smul.u32 64, %s366
        %p368 = scmp.lt.s32.totalorder %s25, 1
        %s369 = scalar_select %p368, %s25, 1
        %s370 = smul.addr %s369, 4
        %s371 = scalar_lea.vmem %s1, %s370
        %v373 = vld [vmem:[%s362] sm:$0xf]
        %v374 = vld [vmem:[%s362 + $0x4] sm:$0xf]
        %v375 = vld [vmem:[%s362 + $0x8] sm:$0xf]
        %v376 = vld [vmem:[%s362 + $0xc] sm:$0xf]
        %v377 = vld [vmem:[%s362 + $0x10] sm:$0xf]
        %v378 = vld [vmem:[%s362 + $0x14] sm:$0xf]
        %v379 = vld [vmem:[%s362 + $0x18] sm:$0xf]
        %v380 = vld [vmem:[%s362 + $0x1c] sm:$0xf]
        %v381 = vld [vmem:[%s2] sm:$0xf]
        %v382 = vld [vmem:[%s2 + $0x4] sm:$0xf]
        %v383 = vld [vmem:[%s2 + $0x8] sm:$0xf]
        %v384 = vld [vmem:[%s2 + $0xc] sm:$0xf]
        %v385 = vld [vmem:[%s2 + $0x10] sm:$0xf]
        %v386 = vld [vmem:[%s2 + $0x14] sm:$0xf]
        %v387 = vld [vmem:[%s2 + $0x18] sm:$0xf]
        %v388 = vld [vmem:[%s2 + $0x1c] sm:$0xf]
        %v389 = vld [vmem:[%s2 + $0x20] sm:$0xf]
        %v390 = vld [vmem:[%s2 + $0x24] sm:$0xf]
        %v391 = vld [vmem:[%s2 + $0x28] sm:$0xf]
        %v392 = vld [vmem:[%s2 + $0x2c] sm:$0xf]
        %v393 = vld [vmem:[%s2 + $0x30] sm:$0xf]
        %v394 = vld [vmem:[%s2 + $0x34] sm:$0xf]
        %v395 = vld [vmem:[%s2 + $0x38] sm:$0xf]
        %v396 = vld [vmem:[%s2 + $0x3c] sm:$0xf]
        %v397 = vld [vmem:[%s3] sm:$0x1]
        %v399 = vlaneseq
        %v400 = vshrl.u32 %v399, 7
        %v401 = vsub.s32 0, %v400
        %v402 = vrot.slane %v397, %v401
        %v412 = vunpack.c.l.b16 %v373
        %v413 = vunpack.c.l.b16 %v374
        %v414 = vunpack.c.l.b16 %v375
        %v415 = vunpack.c.l.b16 %v376
        %v416 = vunpack.c.l.b16 %v377
        %v417 = vunpack.c.l.b16 %v378
        %v418 = vunpack.c.l.b16 %v379
        %v419 = vunpack.c.l.b16 %v380
        %v420 = vpack.c.b16 %v413, %v412
        %v421 = vpack.c.b16 %v415, %v414
        %v422 = vpack.c.b16 %v417, %v416
        %v423 = vpack.c.b16 %v419, %v418
        %v444 = vunpack.c.l.b16 %v381
        %v445 = vunpack.c.l.b16 %v382
        %v446 = vunpack.c.l.b16 %v383
        %v447 = vunpack.c.l.b16 %v384
        %v448 = vunpack.c.l.b16 %v385
        %v449 = vunpack.c.l.b16 %v386
        %v450 = vunpack.c.l.b16 %v387
        %v451 = vunpack.c.l.b16 %v388
        %v452 = vunpack.c.l.b16 %v389
        %v453 = vunpack.c.l.b16 %v390
        %v454 = vunpack.c.l.b16 %v391
        %v455 = vunpack.c.l.b16 %v392
        %v456 = vunpack.c.l.b16 %v393
        %v457 = vunpack.c.l.b16 %v394
        %v458 = vunpack.c.l.b16 %v395
        %v459 = vunpack.c.l.b16 %v396
        %v460 = vpack.c.b16 %v445, %v444
        %v461 = vpack.c.b16 %v447, %v446
        %v462 = vpack.c.b16 %v449, %v448
        %v463 = vpack.c.b16 %v451, %v450
        %v464 = vpack.c.b16 %v453, %v452
        %v465 = vpack.c.b16 %v455, %v454
        %v466 = vpack.c.b16 %v457, %v456
        %v467 = vpack.c.b16 %v459, %v458
        %476 = vmatprep.subr.bf16.mxu0 0
        %477 = vmatpush1.bf16.msra.mxu0 %v460
        %478 = vmatprep.subr.bf16.mxu0 0
        %479 = vmatpush1.bf16.msra.mxu0 %v461
        %480 = vmatprep.subr.bf16.mxu0 0
        %481 = vmatpush1.bf16.msra.mxu0 %v462
        %482 = vmatprep.subr.bf16.mxu0 0
        %483 = vmatpush1.bf16.msra.mxu0 %v463
        %484 = vmatprep.subr.bf16.mxu0 0
        %485 = vmatpush1.bf16.msra.mxu0 %v464
        %486 = vmatprep.subr.bf16.mxu0 0
        %487 = vmatpush1.bf16.msra.mxu0 %v465
        %488 = vmatprep.subr.bf16.mxu0 0
        %489 = vmatpush1.bf16.msra.mxu0 %v466
        %490 = vmatprep.subr.bf16.mxu0 0
        %491 = vmatpush1.bf16.msra.mxu0 %v467
        %492 = vmatprep.subr.bf16.mxu0 0
        %493 = vmatpush1.bf16.msra.mxu0 0
        %494 = vmatprep.subr.bf16.mxu0 0
        %495 = vmatpush1.bf16.msra.mxu0 0
        %496 = vmatprep.subr.bf16.mxu0 0
        %497 = vmatpush1.bf16.msra.mxu0 0
        %498 = vmatprep.subr.bf16.mxu0 0
        %499 = vmatpush1.bf16.msra.mxu0 0
        %500 = vmatprep.subr.bf16.mxu0 0
        %501 = vmatpush1.bf16.msra.mxu0 0
        %502 = vmatprep.subr.bf16.mxu0 0
        %503 = vmatpush1.bf16.msra.mxu0 0
        %504 = vmatprep.subr.bf16.mxu0 0
        %505 = vmatpush1.bf16.msra.mxu0 0
        %506 = vmatprep.subr.bf16.mxu0 0
        %507 = vmatpush1.bf16.msra.mxu0 0
        %508 = vmatprep.mubr.bf16.mxu0 0
        %509 = vmatmul.mubr.bf16.gmra.mrb[0].mxu0 %v420
        %v510 = vpop.f32.mrb[0].mxu0
        %v511 = vadd.f32 %v402, %v510
        %v512 = vpop.f32.mrb[0].mxu0
        %v513 = vpop.f32.mrb[0].mxu0
        %v514 = vadd.f32 %v402, %v513
        %v515 = vpop.f32.mrb[0].mxu0
        %516 = vmatprep.mubr.bf16.mxu0 0
        %517 = vmatmul.mubr.bf16.gmra.mrb[0].mxu0 %v421
        %v518 = vpop.f32.mrb[0].mxu0
        %v519 = vadd.f32 %v402, %v518
        %v520 = vpop.f32.mrb[0].mxu0
        %v521 = vpop.f32.mrb[0].mxu0
        %v522 = vadd.f32 %v402, %v521
        %v523 = vpop.f32.mrb[0].mxu0
        %524 = vmatprep.mubr.bf16.mxu0 0
        %525 = vmatmul.mubr.bf16.gmra.mrb[0].mxu0 %v422
        %v526 = vpop.f32.mrb[0].mxu0
        %v527 = vadd.f32 %v402, %v526
        %v528 = vpop.f32.mrb[0].mxu0
        %v529 = vpop.f32.mrb[0].mxu0
        %v530 = vadd.f32 %v402, %v529
        %v531 = vpop.f32.mrb[0].mxu0
        %532 = vmatprep.mubr.bf16.mxu0 0
        %533 = vmatmul.mubr.bf16.gmra.mrb[0].mxu0 %v423
        %v534 = vpop.f32.mrb[0].mxu0
        %v535 = vadd.f32 %v402, %v534
        %v536 = vpop.f32.mrb[0].mxu0
        %v537 = vpop.f32.mrb[0].mxu0
        %v538 = vadd.f32 %v402, %v537
        %v539 = vpop.f32.mrb[0].mxu0
        %540 = vdwg.mxu0
        %v541 = vld [vmem:[%s371] sm:$0xf]
        %v542 = vld [vmem:[%s4] sm:$0xf]
        %v543 = vld [vmem:[%s4 + $0x4] sm:$0xf]
        %v544 = vld [vmem:[%s4 + $0x8] sm:$0xf]
        %v545 = vld [vmem:[%s4 + $0xc] sm:$0xf]
        %v550 = vunpack.c.l.b16 %v542
        %v551 = vunpack.c.l.b16 %v543
        %v552 = vunpack.c.l.b16 %v544
        %v553 = vunpack.c.l.b16 %v545
        %v554 = vpack.c.b16 %v551, %v550
        %v555 = vpack.c.b16 %v553, %v552
        %vm558 = vcmask 261120
        %v560 = vsel %vm558, %v541, 0
        %562 = vmatprep.subr.bf16.mxu0 0
        %563 = vmatpush1.bf16.msra.mxu0 %v554
        %564 = vmatprep.subr.bf16.mxu0 0
        %565 = vmatpush1.bf16.msra.mxu0 %v555
        %566 = vmatprep.subr.bf16.mxu0 0
        %567 = vmatpush1.bf16.msra.mxu0 0
        %568 = vmatprep.subr.bf16.mxu0 0
        %569 = vmatpush1.bf16.msra.mxu0 0
        %570 = vmatprep.subr.bf16.mxu0 0
        %571 = vmatpush1.bf16.msra.mxu0 0
        %572 = vmatprep.subr.bf16.mxu0 0
        %573 = vmatpush1.bf16.msra.mxu0 0
        %574 = vmatprep.subr.bf16.mxu0 0
        %575 = vmatpush1.bf16.msra.mxu0 0
        %576 = vmatprep.subr.bf16.mxu0 0
        %577 = vmatpush1.bf16.msra.mxu0 0
        %578 = vmatprep.subr.bf16.mxu0 0
        %579 = vmatpush1.bf16.msra.mxu0 0
        %580 = vmatprep.subr.bf16.mxu0 0
        %581 = vmatpush1.bf16.msra.mxu0 0
        %582 = vmatprep.subr.bf16.mxu0 0
        %583 = vmatpush1.bf16.msra.mxu0 0
        %584 = vmatprep.subr.bf16.mxu0 0
        %585 = vmatpush1.bf16.msra.mxu0 0
        %586 = vmatprep.subr.bf16.mxu0 0
        %587 = vmatpush1.bf16.msra.mxu0 0
        %588 = vmatprep.subr.bf16.mxu0 0
        %589 = vmatpush1.bf16.msra.mxu0 0
        %590 = vmatprep.subr.bf16.mxu0 0
        %591 = vmatpush1.bf16.msra.mxu0 0
        %592 = vmatprep.subr.bf16.mxu0 0
        %593 = vmatpush1.bf16.msra.mxu0 0
        %594 = vmatprep.mubr.bf16.mxu0 0
        %595 = vmatmul.mubr.bf16.gmra.mrb[0].mxu0 %v560
        %v596 = vpop.f32.mrb[0].mxu0
        %v597 = vadd.f32 0.0, %v596
        %v598 = vpop.f32.mrb[0].mxu0
        %v599 = vpop.f32.mrb[0].mxu0
        %v600 = vpop.f32.mrb[0].mxu0
        %601 = vdwg.mxu0
        %v603 = vcombine.high %v597, %v597
        %v605 = vunpack.c.l.s4 1966171168
        %v606 = vunpack.c.0.s8 %v605
        %v607 = vlaneseq
        %v608 = vshrl.u32 %v607, 7
        %v609 = vsub.s32 %v606, %v608
        %v610 = vrot.slane %v597, %v609
        %v612 = vunpack.c.l.s4 1966171168
        %v613 = vunpack.c.0.s8 %v612
        %v614 = vlaneseq
        %v615 = vshrl.u32 %v614, 7
        %v616 = vsub.s32 %v613, %v615
        %v617 = vrot.slane %v603, %v616
        %v618 = vcombine.high %v610, %v610
        %v619 = vcombine.high %v617, %v617
        %v621 = vunpack.c.l.s4 1966171168
        %v622 = vunpack.c.0.s8 %v621
        %v623 = vlaneseq
        %v624 = vshrl.u32 %v623, 7
        %v625 = vsub.s32 %v622, %v624
        %v626 = vrot.slane %v610, %v625
        %v628 = vunpack.c.l.s4 1966171168
        %v629 = vunpack.c.0.s8 %v628
        %v630 = vlaneseq
        %v631 = vshrl.u32 %v630, 7
        %v632 = vsub.s32 %v629, %v631
        %v633 = vrot.slane %v617, %v632
        %v635 = vunpack.c.l.s4 1966171168
        %v636 = vunpack.c.0.s8 %v635
        %v637 = vlaneseq
        %v638 = vshrl.u32 %v637, 7
        %v639 = vsub.s32 %v636, %v638
        %v640 = vrot.slane %v618, %v639
        %v642 = vunpack.c.l.s4 1966171168
        %v643 = vunpack.c.0.s8 %v642
        %v644 = vlaneseq
        %v645 = vshrl.u32 %v644, 7
        %v646 = vsub.s32 %v643, %v645
        %v647 = vrot.slane %v619, %v646
        %v648 = vcombine.high %v626, %v626
        %v649 = vcombine.high %v633, %v633
        %v650 = vcombine.high %v640, %v640
        %v651 = vcombine.high %v647, %v647
        %v652 = vlaneseq
        %v653 = vshrl.u32 %v652, 7
        %v654 = vsub.s32 0, %v653
        %v655 = vrot.slane %v626, %v654
        %v656 = vlaneseq
        %v657 = vshrl.u32 %v656, 7
        %v658 = vsub.s32 0, %v657
        %v659 = vrot.slane %v640, %v658
        %v660 = vlaneseq
        %v661 = vshrl.u32 %v660, 7
        %v662 = vsub.s32 0, %v661
        %v663 = vrot.slane %v648, %v662
        %v664 = vlaneseq
        %v665 = vshrl.u32 %v664, 7
        %v666 = vsub.s32 0, %v665
        %v667 = vrot.slane %v650, %v666
        %v668 = vlaneseq
        %v669 = vshrl.u32 %v668, 7
        %v670 = vsub.s32 0, %v669
        %v671 = vrot.slane %v633, %v670
        %v672 = vlaneseq
        %v673 = vshrl.u32 %v672, 7
        %v674 = vsub.s32 0, %v673
        %v675 = vrot.slane %v647, %v674
        %v676 = vlaneseq
        %v677 = vshrl.u32 %v676, 7
        %v678 = vsub.s32 0, %v677
        %v679 = vrot.slane %v649, %v678
        %v680 = vlaneseq
        %v681 = vshrl.u32 %v680, 7
        %v682 = vsub.s32 0, %v681
        %v683 = vrot.slane %v651, %v682
        %684 = vrot.lane.b32.xlu0 %v655, 32
        %v685 = vpop.permute.xlu0 %684
        %686 = vrot.lane.b32.xlu0 %v659, 32
        %v687 = vpop.permute.xlu0 %686
        %688 = vrot.lane.b32.xlu0 %v663, 32
        %v689 = vpop.permute.xlu0 %688
        %690 = vrot.lane.b32.xlu0 %v667, 32
        %v691 = vpop.permute.xlu0 %690
        %692 = vrot.lane.b32.xlu0 %v671, 32
        %v693 = vpop.permute.xlu0 %692
        %694 = vrot.lane.b32.xlu0 %v675, 32
        %v695 = vpop.permute.xlu0 %694
        %696 = vrot.lane.b32.xlu0 %v679, 32
        %v697 = vpop.permute.xlu0 %696
        %698 = vrot.lane.b32.xlu0 %v683, 32
        %v699 = vpop.permute.xlu0 %698
        %v708 = vadd.f32 %v511, %v685
        %v709 = vadd.f32 %v514, %v687
        %v710 = vadd.f32 %v519, %v689
        %v711 = vadd.f32 %v522, %v691
        %v712 = vadd.f32 %v527, %v693
        %v713 = vadd.f32 %v530, %v695
        %v714 = vadd.f32 %v535, %v697
        %v715 = vadd.f32 %v538, %v699
        %v716 = vmax.f32 %v708, 0.0
        %v717 = vmax.f32 %v709, 0.0
        %v718 = vmax.f32 %v710, 0.0
        %v719 = vmax.f32 %v711, 0.0
        %v720 = vmax.f32 %v712, 0.0
        %v721 = vmax.f32 %v713, 0.0
        %v722 = vmax.f32 %v714, 0.0
        %v723 = vmax.f32 %v715, 0.0
        %v724 = vpack.c.bf16 %v717, %v716
        %v725 = vpack.c.bf16 %v719, %v718
        %v726 = vpack.c.bf16 %v721, %v720
        %v727 = vpack.c.bf16 %v723, %v722
        %v728 = vld [vmem:[%s5] sm:$0xf]
        %v729 = vld [vmem:[%s5 + $0x4] sm:$0xf]
        %v730 = vld [vmem:[%s5 + $0x8] sm:$0xf]
        %v731 = vld [vmem:[%s5 + $0xc] sm:$0xf]
        %v732 = vld [vmem:[%s6] sm:$0x1]
        %v734 = vlaneseq
        %v735 = vshrl.u32 %v734, 7
        %v736 = vsub.s32 0, %v735
        %v737 = vrot.slane %v732, %v736
        %743 = vrot.lane.b32.xlu0 %v724, 96
        %v744 = vpop.permute.xlu0 %743
        %745 = vrot.lane.b32.xlu0 %v725, 96
        %v746 = vpop.permute.xlu0 %745
        %747 = vrot.lane.b32.xlu0 %v726, 96
        %v748 = vpop.permute.xlu0 %747
        %749 = vrot.lane.b32.xlu0 %v727, 96
        %v750 = vpop.permute.xlu0 %749
        %v755 = vunpack.c.l.b16 %v728
        %v756 = vunpack.c.l.b16 %v729
        %v757 = vunpack.c.l.b16 %v730
        %v758 = vunpack.c.l.b16 %v731
        %v759 = vpack.c.b16 %v756, %v755
        %v760 = vpack.c.b16 %v758, %v757
        %v764 = vsel %vm558, %v744, 0
        %v767 = vsel %vm558, %v746, 0
        %v770 = vsel %vm558, %v748, 0
        %v773 = vsel %vm558, %v750, 0
        %775 = vmatprep.subr.bf16.mxu0 0
        %776 = vmatpush1.bf16.msra.mxu0 %v759
        %777 = vmatprep.subr.bf16.mxu0 0
        %778 = vmatpush1.bf16.msra.mxu0 %v760
        %779 = vmatprep.subr.bf16.mxu0 0
        %780 = vmatpush1.bf16.msra.mxu0 0
        %781 = vmatprep.subr.bf16.mxu0 0
        %782 = vmatpush1.bf16.msra.mxu0 0
        %783 = vmatprep.subr.bf16.mxu0 0
        %784 = vmatpush1.bf16.msra.mxu0 0
        %785 = vmatprep.subr.bf16.mxu0 0
        %786 = vmatpush1.bf16.msra.mxu0 0
        %787 = vmatprep.subr.bf16.mxu0 0
        %788 = vmatpush1.bf16.msra.mxu0 0
        %789 = vmatprep.subr.bf16.mxu0 0
        %790 = vmatpush1.bf16.msra.mxu0 0
        %791 = vmatprep.subr.bf16.mxu0 0
        %792 = vmatpush1.bf16.msra.mxu0 0
        %793 = vmatprep.subr.bf16.mxu0 0
        %794 = vmatpush1.bf16.msra.mxu0 0
        %795 = vmatprep.subr.bf16.mxu0 0
        %796 = vmatpush1.bf16.msra.mxu0 0
        %797 = vmatprep.subr.bf16.mxu0 0
        %798 = vmatpush1.bf16.msra.mxu0 0
        %799 = vmatprep.subr.bf16.mxu0 0
        %800 = vmatpush1.bf16.msra.mxu0 0
        %801 = vmatprep.subr.bf16.mxu0 0
        %802 = vmatpush1.bf16.msra.mxu0 0
        %803 = vmatprep.subr.bf16.mxu0 0
        %804 = vmatpush1.bf16.msra.mxu0 0
        %805 = vmatprep.subr.bf16.mxu0 0
        %806 = vmatpush1.bf16.msra.mxu0 0
        %807 = vmatprep.mubr.bf16.mxu0 0
        %808 = vmatmul.mubr.bf16.gmra.mrb[0].mxu0 %v764
        %v809 = vpop.f32.mrb[0].mxu0
        %v810 = vadd.f32 %v737, %v809
        %v811 = vpop.f32.mrb[0].mxu0
        %v812 = vpop.f32.mrb[0].mxu0
        %v813 = vadd.f32 %v737, %v812
        %v814 = vpop.f32.mrb[0].mxu0
        %815 = vmatprep.mubr.bf16.mxu0 0
        %816 = vmatmul.mubr.bf16.gmra.mrb[0].mxu0 %v767
        %v817 = vpop.f32.mrb[0].mxu0
        %v818 = vadd.f32 %v737, %v817
        %v819 = vpop.f32.mrb[0].mxu0
        %v820 = vpop.f32.mrb[0].mxu0
        %v821 = vadd.f32 %v737, %v820
        %v822 = vpop.f32.mrb[0].mxu0
        %823 = vmatprep.mubr.bf16.mxu0 0
        %824 = vmatmul.mubr.bf16.gmra.mrb[0].mxu0 %v770
        %v825 = vpop.f32.mrb[0].mxu0
        %v826 = vadd.f32 %v737, %v825
        %v827 = vpop.f32.mrb[0].mxu0
        %v828 = vpop.f32.mrb[0].mxu0
        %v829 = vadd.f32 %v737, %v828
        %v830 = vpop.f32.mrb[0].mxu0
        %831 = vmatprep.mubr.bf16.mxu0 0
        %832 = vmatmul.mubr.bf16.gmra.mrb[0].mxu0 %v773
        %v833 = vpop.f32.mrb[0].mxu0
        %v834 = vadd.f32 %v737, %v833
        %v835 = vpop.f32.mrb[0].mxu0
        %v836 = vpop.f32.mrb[0].mxu0
        %v837 = vadd.f32 %v737, %v836
        %v838 = vpop.f32.mrb[0].mxu0
        %839 = vdwg.mxu0
        %v840 = vmax.f32 %v810, 0.0
        %v841 = vmax.f32 %v813, 0.0
        %v842 = vmax.f32 %v818, 0.0
        %v843 = vmax.f32 %v821, 0.0
        %v844 = vmax.f32 %v826, 0.0
        %v845 = vmax.f32 %v829, 0.0
        %v846 = vmax.f32 %v834, 0.0
        %v847 = vmax.f32 %v837, 0.0
        %v848 = vld [vmem:[%s7] sm:$0x1]
        %v850 = vlaneseq
        %v851 = vshrl.u32 %v850, 7
        %v852 = vsub.s32 0, %v851
        %v853 = vrot.slane %v848, %v852
        %v855 = vmul.f32 %v840, %v853
        %v856 = vmul.f32 %v841, %v853
        %v857 = vmul.f32 %v842, %v853
        %v858 = vmul.f32 %v843, %v853
        %v859 = vmul.f32 %v844, %v853
        %v860 = vmul.f32 %v845, %v853
        %v861 = vmul.f32 %v846, %v853
        %v862 = vmul.f32 %v847, %v853
        %v863 = vsel %vm558, %v855, 0.0
        %864 = vadd.xlane.f32.xlu0 %v863
        %v865 = vpop.xlane.xlu0 %864
        %v866 = vsel %vm558, %v856, 0.0
        %867 = vadd.xlane.f32.xlu0 %v866
        %v868 = vpop.xlane.xlu0 %867
        %v869 = vsel %vm558, %v857, 0.0
        %870 = vadd.xlane.f32.xlu0 %v869
        %v871 = vpop.xlane.xlu0 %870
        %v872 = vsel %vm558, %v858, 0.0
        %873 = vadd.xlane.f32.xlu0 %v872
        %v874 = vpop.xlane.xlu0 %873
        %v875 = vsel %vm558, %v859, 0.0
        %876 = vadd.xlane.f32.xlu0 %v875
        %v877 = vpop.xlane.xlu0 %876
        %v878 = vsel %vm558, %v860, 0.0
        %879 = vadd.xlane.f32.xlu0 %v878
        %v880 = vpop.xlane.xlu0 %879
        %v881 = vsel %vm558, %v861, 0.0
        %882 = vadd.xlane.f32.xlu0 %v881
        %v883 = vpop.xlane.xlu0 %882
        %v884 = vsel %vm558, %v862, 0.0
        %885 = vadd.xlane.f32.xlu0 %v884
        %v886 = vpop.xlane.xlu0 %885
        %v887 = vld [vmem:[#allocation2] sm:$0x1]
        %v889 = vlaneseq
        %v890 = vshrl.u32 %v889, 7
        %v891 = vsub.s32 0, %v890
        %v892 = vrot.slane %v887, %v891
        %v894 = vadd.f32 %v865, %v892
        %v895 = vadd.f32 %v868, %v892
        %v896 = vadd.f32 %v871, %v892
        %v897 = vadd.f32 %v874, %v892
        %v898 = vadd.f32 %v877, %v892
        %v899 = vadd.f32 %v880, %v892
        %v900 = vadd.f32 %v883, %v892
        %v901 = vadd.f32 %v886, %v892
        %vm902 = vcmask 7168
        %v903 = vsel %vm902, %v894, -inf
        %v904 = vrot.slane %v903, 4
        %v905 = vmax.f32 %v903, %v904
        %v906 = vrot.slane %v905, 2
        %v907 = vmax.f32 %v905, %v906
        %v908 = vrot.slane %v907, 1
        %v909 = vmax.f32 %v907, %v908
        %v910 = vsel %vm902, %v895, -inf
        %v911 = vrot.slane %v910, 4
        %v912 = vmax.f32 %v910, %v911
        %v913 = vrot.slane %v912, 2
        %v914 = vmax.f32 %v912, %v913
        %v915 = vrot.slane %v914, 1
        %v916 = vmax.f32 %v914, %v915
        %v917 = vsel %vm902, %v896, -inf
        %v918 = vrot.slane %v917, 4
        %v919 = vmax.f32 %v917, %v918
        %v920 = vrot.slane %v919, 2
        %v921 = vmax.f32 %v919, %v920
        %v922 = vrot.slane %v921, 1
        %v923 = vmax.f32 %v921, %v922
        %v924 = vsel %vm902, %v897, -inf
        %v925 = vrot.slane %v924, 4
        %v926 = vmax.f32 %v924, %v925
        %v927 = vrot.slane %v926, 2
        %v928 = vmax.f32 %v926, %v927
        %v929 = vrot.slane %v928, 1
        %v930 = vmax.f32 %v928, %v929
        %v931 = vsel %vm902, %v898, -inf
        %v932 = vrot.slane %v931, 4
        %v933 = vmax.f32 %v931, %v932
        %v934 = vrot.slane %v933, 2
        %v935 = vmax.f32 %v933, %v934
        %v936 = vrot.slane %v935, 1
        %v937 = vmax.f32 %v935, %v936
        %v938 = vsel %vm902, %v899, -inf
        %v939 = vrot.slane %v938, 4
        %v940 = vmax.f32 %v938, %v939
        %v941 = vrot.slane %v940, 2
        %v942 = vmax.f32 %v940, %v941
        %v943 = vrot.slane %v942, 1
        %v944 = vmax.f32 %v942, %v943
        %v945 = vsel %vm902, %v900, -inf
        %v946 = vrot.slane %v945, 4
        %v947 = vmax.f32 %v945, %v946
        %v948 = vrot.slane %v947, 2
        %v949 = vmax.f32 %v947, %v948
        %v950 = vrot.slane %v949, 1
        %v951 = vmax.f32 %v949, %v950
        %v952 = vsel %vm902, %v901, -inf
        %v953 = vrot.slane %v952, 4
        %v954 = vmax.f32 %v952, %v953
        %v955 = vrot.slane %v954, 2
        %v956 = vmax.f32 %v954, %v955
        %v957 = vrot.slane %v956, 1
        %v958 = vmax.f32 %v956, %v957
        %v959 = vsub.f32 %v894, %v909
        %v960 = vsub.f32 %v895, %v916
        %v961 = vsub.f32 %v896, %v923
        %v962 = vsub.f32 %v897, %v930
        %v963 = vsub.f32 %v898, %v937
        %v964 = vsub.f32 %v899, %v944
        %v965 = vsub.f32 %v900, %v951
        %v966 = vsub.f32 %v901, %v958
        %v967 = vmul.f32 %v959, 1.442695
        %v968 = vpow.pop %v967
        %v969 = vmul.f32 %v960, 1.442695
        %v970 = vpow.pop %v969
        %v971 = vmul.f32 %v961, 1.442695
        %v972 = vpow.pop %v971
        %v973 = vmul.f32 %v962, 1.442695
        %v974 = vpow.pop %v973
        %v975 = vmul.f32 %v963, 1.442695
        %v976 = vpow.pop %v975
        %v977 = vmul.f32 %v964, 1.442695
        %v978 = vpow.pop %v977
        %v979 = vmul.f32 %v965, 1.442695
        %v980 = vpow.pop %v979
        %v981 = vmul.f32 %v966, 1.442695
        %v982 = vpow.pop %v981
        %v983 = vsel %vm902, %v968, 0.0
        %v984 = vrot.slane %v983, 4
        %v985 = vadd.f32 %v983, %v984
        %v986 = vrot.slane %v985, 2
        %v987 = vadd.f32 %v985, %v986
        %v988 = vrot.slane %v987, 1
        %v989 = vadd.f32 %v987, %v988
        %v990 = vsel %vm902, %v970, 0.0
        %v991 = vrot.slane %v990, 4
        %v992 = vadd.f32 %v990, %v991
        %v993 = vrot.slane %v992, 2
        %v994 = vadd.f32 %v992, %v993
        %v995 = vrot.slane %v994, 1
        %v996 = vadd.f32 %v994, %v995
        %v997 = vsel %vm902, %v972, 0.0
        %v998 = vrot.slane %v997, 4
        %v999 = vadd.f32 %v997, %v998
        %v1000 = vrot.slane %v999, 2
        %v1001 = vadd.f32 %v999, %v1000
        %v1002 = vrot.slane %v1001, 1
        %v1003 = vadd.f32 %v1001, %v1002
        %v1004 = vsel %vm902, %v974, 0.0
        %v1005 = vrot.slane %v1004, 4
        %v1006 = vadd.f32 %v1004, %v1005
        %v1007 = vrot.slane %v1006, 2
        %v1008 = vadd.f32 %v1006, %v1007
        %v1009 = vrot.slane %v1008, 1
        %v1010 = vadd.f32 %v1008, %v1009
        %v1011 = vsel %vm902, %v976, 0.0
        %v1012 = vrot.slane %v1011, 4
        %v1013 = vadd.f32 %v1011, %v1012
        %v1014 = vrot.slane %v1013, 2
        %v1015 = vadd.f32 %v1013, %v1014
        %v1016 = vrot.slane %v1015, 1
        %v1017 = vadd.f32 %v1015, %v1016
        %v1018 = vsel %vm902, %v978, 0.0
        %v1019 = vrot.slane %v1018, 4
        %v1020 = vadd.f32 %v1018, %v1019
        %v1021 = vrot.slane %v1020, 2
        %v1022 = vadd.f32 %v1020, %v1021
        %v1023 = vrot.slane %v1022, 1
        %v1024 = vadd.f32 %v1022, %v1023
        %v1025 = vsel %vm902, %v980, 0.0
        %v1026 = vrot.slane %v1025, 4
        %v1027 = vadd.f32 %v1025, %v1026
        %v1028 = vrot.slane %v1027, 2
        %v1029 = vadd.f32 %v1027, %v1028
        %v1030 = vrot.slane %v1029, 1
        %v1031 = vadd.f32 %v1029, %v1030
        %v1032 = vsel %vm902, %v982, 0.0
        %v1033 = vrot.slane %v1032, 4
        %v1034 = vadd.f32 %v1032, %v1033
        %v1035 = vrot.slane %v1034, 2
        %v1036 = vadd.f32 %v1034, %v1035
        %v1037 = vrot.slane %v1036, 1
        %v1038 = vadd.f32 %v1036, %v1037
        %v1039 = vrcp.pop %v989
        %v1040 = vmul.f32 %v968, %v1039
        %v1041 = vrcp.pop %v996
        %v1042 = vmul.f32 %v970, %v1041
        %v1043 = vrcp.pop %v1003
        %v1044 = vmul.f32 %v972, %v1043
        %v1045 = vrcp.pop %v1010
        %v1046 = vmul.f32 %v974, %v1045
        %v1047 = vrcp.pop %v1017
        %v1048 = vmul.f32 %v976, %v1047
        %v1049 = vrcp.pop %v1024
        %v1050 = vmul.f32 %v978, %v1049
        %v1051 = vrcp.pop %v1031
        %v1052 = vmul.f32 %v980, %v1051
        %v1053 = vrcp.pop %v1038
        %v1054 = vmul.f32 %v982, %v1053
        %1056 = vset.pattern.permute.xlu0 0
        %1057 = vperm.xlu0 %1056, %v1040
        %v1058 = vpop.permute.xlu0 %1057
        %1061 = vset.pattern.permute.xlu0 0
        %1062 = vperm.xlu0 %1061, %v1042
        %v1063 = vpop.permute.xlu0 %1062
        %1066 = vset.pattern.permute.xlu0 0
        %1067 = vperm.xlu0 %1066, %v1044
        %v1068 = vpop.permute.xlu0 %1067
        %1071 = vset.pattern.permute.xlu0 0
        %1072 = vperm.xlu0 %1071, %v1046
        %v1073 = vpop.permute.xlu0 %1072
        %1076 = vset.pattern.permute.xlu0 0
        %1077 = vperm.xlu0 %1076, %v1048
        %v1078 = vpop.permute.xlu0 %1077
        %1081 = vset.pattern.permute.xlu0 0
        %1082 = vperm.xlu0 %1081, %v1050
        %v1083 = vpop.permute.xlu0 %1082
        %1086 = vset.pattern.permute.xlu0 0
        %1087 = vperm.xlu0 %1086, %v1052
        %v1088 = vpop.permute.xlu0 %1087
        %1091 = vset.pattern.permute.xlu0 0
        %1092 = vperm.xlu0 %1091, %v1054
        %v1093 = vpop.permute.xlu0 %1092
        %v1095 = vmul.f32 %v1058, %v511
        %v1096 = vmul.f32 %v1063, %v514
        %v1097 = vmul.f32 %v1068, %v519
        %v1098 = vmul.f32 %v1073, %v522
        %v1099 = vmul.f32 %v1078, %v527
        %v1100 = vmul.f32 %v1083, %v530
        %v1101 = vmul.f32 %v1088, %v535
        %v1102 = vmul.f32 %v1093, %v538
        %v1103 = vsel %vm558, %v1095, 0.0
        %v1104 = vrot.slane %v1103, 4
        %v1105 = vadd.f32 %v1103, %v1104
        %v1106 = vrot.slane %v1105, 2
        %v1107 = vadd.f32 %v1105, %v1106
        %v1108 = vrot.slane %v1107, 1
        %v1109 = vadd.f32 %v1107, %v1108
        %v1110 = vsel %vm558, %v1096, 0.0
        %v1111 = vrot.slane %v1110, 4
        %v1112 = vadd.f32 %v1110, %v1111
        %v1113 = vrot.slane %v1112, 2
        %v1114 = vadd.f32 %v1112, %v1113
        %v1115 = vrot.slane %v1114, 1
        %v1116 = vadd.f32 %v1114, %v1115
        %v1117 = vsel %vm558, %v1097, 0.0
        %v1118 = vrot.slane %v1117, 4
        %v1119 = vadd.f32 %v1117, %v1118
        %v1120 = vrot.slane %v1119, 2
        %v1121 = vadd.f32 %v1119, %v1120
        %v1122 = vrot.slane %v1121, 1
        %v1123 = vadd.f32 %v1121, %v1122
        %v1124 = vsel %vm558, %v1098, 0.0
        %v1125 = vrot.slane %v1124, 4
        %v1126 = vadd.f32 %v1124, %v1125
        %v1127 = vrot.slane %v1126, 2
        %v1128 = vadd.f32 %v1126, %v1127
        %v1129 = vrot.slane %v1128, 1
        %v1130 = vadd.f32 %v1128, %v1129
        %v1131 = vsel %vm558, %v1099, 0.0
        %v1132 = vrot.slane %v1131, 4
        %v1133 = vadd.f32 %v1131, %v1132
        %v1134 = vrot.slane %v1133, 2
        %v1135 = vadd.f32 %v1133, %v1134
        %v1136 = vrot.slane %v1135, 1
        %v1137 = vadd.f32 %v1135, %v1136
        %v1138 = vsel %vm558, %v1100, 0.0
        %v1139 = vrot.slane %v1138, 4
        %v1140 = vadd.f32 %v1138, %v1139
        %v1141 = vrot.slane %v1140, 2
        %v1142 = vadd.f32 %v1140, %v1141
        %v1143 = vrot.slane %v1142, 1
        %v1144 = vadd.f32 %v1142, %v1143
        %v1145 = vsel %vm558, %v1101, 0.0
        %v1146 = vrot.slane %v1145, 4
        %v1147 = vadd.f32 %v1145, %v1146
        %v1148 = vrot.slane %v1147, 2
        %v1149 = vadd.f32 %v1147, %v1148
        %v1150 = vrot.slane %v1149, 1
        %v1151 = vadd.f32 %v1149, %v1150
        %v1152 = vsel %vm558, %v1102, 0.0
        %v1153 = vrot.slane %v1152, 4
        %v1154 = vadd.f32 %v1152, %v1153
        %v1155 = vrot.slane %v1154, 2
        %v1156 = vadd.f32 %v1154, %v1155
        %v1157 = vrot.slane %v1156, 1
        %v1158 = vadd.f32 %v1156, %v1157
        %vm1167 = vcmask 1041409
        %v1168 = vsel %vm1167, %v1116, %v1109
        %vm1169 = vcmask 1042434
        %v1170 = vsel %vm1169, %v1123, %v1168
        %vm1171 = vcmask 1043459
        %v1172 = vsel %vm1171, %v1130, %v1170
        %vm1173 = vcmask 1044484
        %v1174 = vsel %vm1173, %v1137, %v1172
        %vm1175 = vcmask 1045509
        %v1176 = vsel %vm1175, %v1144, %v1174
        %vm1177 = vcmask 1046534
        %v1178 = vsel %vm1177, %v1151, %v1176
        %vm1179 = vcmask 1047559
        %v1180 = vsel %vm1179, %v1158, %v1178
        %1182 = vst.msk [vmem:[%s353] sm:$0xff] %vm558, %v1180
        %s1183 = sand.u32 %s232, 1
        %s1184 = scalar_lea.sflag [#allocation4], %s1183
        %s1185 = sand.u32 %s232, 1
        %s1186 = smul.addr %s1185, 8
        %s1187 = scalar_lea.vmem [#allocation3], %s1186
        // Predicated region
        $region57: #{tpu_custom_call.1} parent=55 // pred_check
          %p1188 = pneg %p242
        $region58: #{tpu_custom_call.1} parent=55 // pred_check_branch
          %1190 = sbr.rel (%p1188) target = $region60
        $region59: #{tpu_custom_call.1} parent=55 // pred_region
          %s1192 = ssub.s32 128, 128
          %1193 = vsyncadd %s1184, %s1192
          %s1194 = smul.addr %s25, 128
          %s1195 = scalar_lea.hbm %s9, %s1194
          %s1197 = sshll.u32 %s1187, 4
          %s1198 = int_to_ptr.vmem [resolvable:$true] %s1197
          %1200 = dma.vmem_to_hbm [thread:$0]  %s1198, 128, %s1195, %s1184
        $region60: #{tpu_custom_call.1} parent=55 // pred_fallthru
          _
      $region56: #{tpu_custom_call.1} parent=5 // pred_fallthru
        _
      %p1201 = scmp.le.s32.totalorder 2, %s20
      // Predicated region
      $region61: #{tpu_custom_call.1} parent=5 // pred_check
        %p1202 = pneg %p1201
      $region62: #{tpu_custom_call.1} parent=5 // pred_check_branch
        %1204 = sbr.rel (%p1202) target = $region64
      $region63: #{tpu_custom_call.1} parent=5 // pred_region
        %s1205 = ssub.s32 %s20, 2
        // Predicated region
        $region65: #{tpu_custom_call.1} parent=63 // pred_check
          %p1206 = pneg %p248
        $region66: #{tpu_custom_call.1} parent=63 // pred_check_branch
          %1208 = sbr.rel (%p1206) target = $region68
        $region67: #{tpu_custom_call.1} parent=63 // pred_region
          %s1209 = sand.u32 %s233, 1
          %s1210 = scalar_lea.sflag [#allocation4], %s1209
          %s1211 = sand.u32 %s233, 1
          %s1212 = smul.addr %s1211, 8
          %s1213 = scalar_lea.vmem [#allocation3], %s1212
          %1214 = dma.done %s1210, 128
        $region68: #{tpu_custom_call.1} parent=63 // pred_fallthru
          _
      $region64: #{tpu_custom_call.1} parent=5 // pred_fallthru
        _
    $region6: #{tpu_custom_call.1} parent=1 // loop_footer
      %s24 = sadd.s32 1, %s20
    $region7: #{tpu_custom_call.1} parent=1 // loop_footer_branch
      %19 = sbr.rel target = $region3
    $region8: #{tpu_custom_call.1} parent=1 // loop_exit
      _
    %1215 = vsyncpa [#allocation4], 1
    %s1216 = scalar_lea.sflag [#allocation4], 1
    %1217 = vsyncpa %s1216, 1

</llo_original>
